<compile_context>
chip_gen: v5e
topology: v5e:2x2
jax: 0.10.0
libtpu: 0.0.40
codegen_flags: <defaults>
</compile_context>

<pallas_src>
import jax
import jax.numpy as jnp
from jax.experimental import pallas as pl
from jax.experimental.pallas import tpu as pltpu


# ---------------------------------------------------------------------------
# Small helpers
# ---------------------------------------------------------------------------
def _pick_tile(n, cap):
    """Largest divisor of n that is <= cap (always >= 1)."""
    cap = max(1, min(n, cap))
    for t in range(cap, 0, -1):
        if n % t == 0:
            return t
    return 1


def _padded_bytes(shape, dtype):
    """VMEM bytes of one buffer including (sublane, lane) layout padding."""
    d = jnp.dtype(dtype)
    s = list(shape)
    if len(s) >= 1:
        s[-1] = -(-s[-1] // 128) * 128
    if len(s) >= 2:
        sub = max(8, 32 // d.itemsize)          # 8 for f32, 16 for bf16
        s[-2] = -(-s[-2] // sub) * sub
    n = 1
    for v in s:
        n *= v
    return n * d.itemsize


def _vmem_limit(est_bytes):
    # Explicit scoped-VMEM budget; capped at 48 MiB so there is headroom on
    # v7x (64 MiB / TensorCore).  v5e / v6e (128 MiB) are unaffected.
    return int(min(max(2 * int(est_bytes), 32 * 1024 * 1024), 48 * 1024 * 1024))


# ---------------------------------------------------------------------------
# Kernel 1: ConvTranspose2d(k=2, s=2, bias=False) + BN(folded) + ReLU with the
# 2x2 spatial interleave fused into the kernel.
#
# Weight columns are slab-ordered: col = (dy*2 + dx)*Ch + co (BN scale folded
# in), so lane slice [0:2Ch] is output row 2h and [2Ch:4Ch] is row 2h+1, each
# already ordered (dx, co).  Output array is (N, 2H, W, 2*Ch); the wrapper's
# reshape to (N, 2H, 2W, Ch) is contiguous (free).
# ---------------------------------------------------------------------------
def _upconv_kernel(x_ref, w_ref, bias_ref, o_ref):
    _, tru, w, cin = x_ref.shape
    ch2 = o_ref.shape[-1]                        # 2*Ch  (lanes: dx major, co minor)

    x2 = x_ref[0].reshape(tru * w, cin)
    y = jnp.dot(x2, w_ref[...], preferred_element_type=jnp.float32)
    y = jnp.maximum(y + bias_ref[...], 0.0)
    y = y.reshape(tru, w, 2 * ch2)

    even = y[:, :, :ch2].astype(o_ref.dtype)     # dy = 0 -> output row 2h
    odd = y[:, :, ch2:].astype(o_ref.dtype)      # dy = 1 -> output row 2h+1
    inter = jnp.concatenate([even[:, None], odd[:, None]], axis=1)  # (tru,2,w,ch2)
    o_ref[0] = inter.reshape(2 * tru, w, ch2)


def upconv_bn_relu(x_nhwc, w_t, scale, bias):
    # x_nhwc: (N, H, W, Cin); w_t: torch ConvTranspose2d weight (Cin, Ch, 2, 2)
    N, H, W, Cin = x_nhwc.shape
    Ch = w_t.shape[1]

    # col = (dy*2+dx)*Ch + co, BN scale folded into the columns.
    w_mat = jnp.transpose(w_t, (0, 2, 3, 1)).reshape(Cin, 4 * Ch)
    w_mat = (w_mat * jnp.tile(scale, 4)[None, :]).astype(jnp.bfloat16)
    bias4 = jnp.tile(bias, 4)[None, :].astype(jnp.float32)

    TRU = _pick_tile(H, max(1, 256 // W))        # input rows per grid step

    est = (2 * _padded_bytes((1, TRU, W, Cin), jnp.bfloat16)
           + 2 * _padded_bytes((1, 2 * TRU, W, 2 * Ch), jnp.bfloat16)
           + 2 * _padded_bytes((Cin, 4 * Ch), jnp.bfloat16)
           + 2 * _padded_bytes((1, 4 * Ch), jnp.float32))

    y = pl.pallas_call(
        _upconv_kernel,
        out_shape=jax.ShapeDtypeStruct((N, 2 * H, W, 2 * Ch), jnp.bfloat16),
        grid=(N, H // TRU),
        in_specs=[
            pl.BlockSpec((1, TRU, W, Cin), lambda n, r: (n, r, 0, 0)),
            pl.BlockSpec((Cin, 4 * Ch), lambda n, r: (0, 0)),
            pl.BlockSpec((1, 4 * Ch), lambda n, r: (0, 0)),
        ],
        out_specs=pl.BlockSpec((1, 2 * TRU, W, 2 * Ch), lambda n, r: (n, r, 0, 0)),
        compiler_params=pltpu.CompilerParams(
            dimension_semantics=("parallel", "parallel"),
            vmem_limit_bytes=_vmem_limit(est)),
    )(x_nhwc.astype(jnp.bfloat16), w_mat, bias4)

    # (N, 2H, W, 2*Ch) -> (N, 2H, 2W, Ch): contiguous reshape (free bitcast).
    return y.reshape(N, 2 * H, 2 * W, Ch)


# ---------------------------------------------------------------------------
# Kernel 2: Conv2d(3x3, pad=1, bias=False) + BN(folded) + ReLU over the channel
# concat of `num_in` NHWC inputs (concat fused: one weight slice per input).
#
# Each grid step processes one full image (BlockSpec auto-pipelines across
# images).  A zero-bordered padded copy of each input is built in VMEM, then
# row groups of TR rows are processed with one long-K im2col matmul each.
# ---------------------------------------------------------------------------
def _make_conv3x3_kernel(num_in, H, W, TR, cins, Cout, K):
    n_groups = H // TR

    def kernel(*refs):
        x_refs = refs[:num_in]
        w_ref = refs[num_in]
        bias_ref = refs[num_in + 1]
        o_ref = refs[num_in + 2]
        pads = refs[num_in + 3: num_in + 3 + num_in]
        col_ref = refs[num_in + 3 + num_in]

        # --- build zero-padded copies in VMEM (no HBM pad pass) -------------
        for i in range(num_in):
            zr = jnp.zeros((1, W + 2, cins[i]), jnp.bfloat16)
            pads[i][0:1] = zr                   # top border row
            pads[i][H + 1:H + 2] = zr           # bottom border row

        def fill_body(r, carry):
            for i in range(num_in):
                ci = cins[i]
                zc = jnp.zeros((TR, 1, ci), jnp.bfloat16)
                pads[i][pl.ds(1 + r * TR, TR), 0:1, :] = zc
                pads[i][pl.ds(1 + r * TR, TR), W + 1:W + 2, :] = zc
                pads[i][pl.ds(1 + r * TR, TR), 1:W + 1, :] = (
                    x_refs[i][0, pl.ds(r * TR, TR), :, :])
            return carry

        jax.lax.fori_loop(0, n_groups, fill_body, 0)

        # --- im2col + one long-K matmul per row group ------------------------
        def group(g, carry):
            col = 0
            for i in range(num_in):
                ci = cins[i]
                for t in range(9):
                    dy, dx = t // 3, t % 3
                    tap = pads[i][pl.ds(g * TR + dy, TR), dx:dx + W, :]
                    col_ref[:, col:col + ci] = tap.reshape(TR * W, ci)
                    col += ci
            y = jnp.dot(col_ref[...], w_ref[...],
                        preferred_element_type=jnp.float32)
            y = jnp.maximum(y + bias_ref[...], 0.0)
            o_ref[0, pl.ds(g * TR, TR)] = (
                y.reshape(TR, W, Cout).astype(o_ref.dtype))
            return carry

        jax.lax.fori_loop(0, n_groups, group, 0)

    return kernel


def conv3x3_bn_relu(inputs, weights, scale, bias):
    # inputs: list of NHWC arrays (same N,H,W); weights: list of (Cout, Cin_i, 3, 3)
    N, H, W, _ = inputs[0].shape
    Cout = weights[0].shape[0]
    num_in = len(inputs)
    cins = tuple(int(a.shape[-1]) for a in inputs)
    K = 9 * sum(cins)

    # Rows ordered (input, dy, dx, ci) to match the im2col column order; BN
    # scale folded into the Cout columns.
    w_all = jnp.concatenate(
        [jnp.transpose(w, (2, 3, 1, 0)).reshape(9 * c, Cout)
         for w, c in zip(weights, cins)], axis=0)
    w_all = (w_all * scale[None, :]).astype(jnp.bfloat16)
    bias2d = bias[None, :].astype(jnp.float32)

    TR = _pick_tile(H, max(1, 256 // W))         # rows per im2col matmul

    est = (sum(2 * _padded_bytes((1, H, W, c), jnp.bfloat16) for c in cins)
           + sum(_padded_bytes((H + 2, W + 2, c), jnp.bfloat16) for c in cins)
           + 2 * _padded_bytes((1, H, W, Cout), jnp.bfloat16)
           + 2 * _padded_bytes((K, Cout), jnp.bfloat16)
           + _padded_bytes((TR * W, K), jnp.bfloat16)
           + 2 * _padded_bytes((1, Cout), jnp.float32))

    kernel = _make_conv3x3_kernel(num_in, H, W, TR, cins, Cout, K)

    in_specs = ([pl.BlockSpec((1, H, W, c), lambda n: (n, 0, 0, 0)) for c in cins]
                + [pl.BlockSpec((K, Cout), lambda n: (0, 0)),
                   pl.BlockSpec((1, Cout), lambda n: (0, 0))])
    scratch = ([pltpu.VMEM((H + 2, W + 2, c), jnp.bfloat16) for c in cins]
               + [pltpu.VMEM((TR * W, K), jnp.bfloat16)])

    out = pl.pallas_call(
        kernel,
        out_shape=jax.ShapeDtypeStruct((N, H, W, Cout), jnp.bfloat16),
        grid=(N,),
        in_specs=in_specs,
        out_specs=pl.BlockSpec((1, H, W, Cout), lambda n: (n, 0, 0, 0)),
        scratch_shapes=scratch,
        compiler_params=pltpu.CompilerParams(
            dimension_semantics=("parallel",),
            vmem_limit_bytes=_vmem_limit(est)),
    )(*[a.astype(jnp.bfloat16) for a in inputs], w_all, bias2d)
    return out


# ---------------------------------------------------------------------------
# UpBlock forward (matches PyTorch module semantics, bn=True eval path)
# ---------------------------------------------------------------------------
def up_block_forward(x_nchw, skip_nchw, p):
    x = jnp.transpose(x_nchw, (0, 2, 3, 1)).astype(jnp.bfloat16)     # NCHW->NHWC
    skip = jnp.transpose(skip_nchw, (0, 2, 3, 1)).astype(jnp.bfloat16)

    # x = relu(bn(up(x)))  -- interleave fused in-kernel.
    up = upconv_bn_relu(x, p["up_w"], p["bn_scale"], p["bn_bias"])
    # cat([up, skip], channel) fused into conv1 (weight split along Cin).
    ch = up.shape[-1]
    w1_up, w1_skip = p["conv1_w"][:, :ch], p["conv1_w"][:, ch:]
    h = conv3x3_bn_relu([up, skip], [w1_up, w1_skip],
                        p["bn1_scale"], p["bn1_bias"])
    h = conv3x3_bn_relu([h], [p["conv2_w"]], p["bn2_scale"], p["bn2_bias"])
    # NHWC(bf16) -> NCHW(f32): single fused transpose+upcast.
    return jnp.transpose(h, (0, 3, 1, 2)).astype(jnp.float32)


# ---------------------------------------------------------------------------
# Deterministic parameters + pure-JAX reference (numerical sanity check)
# ---------------------------------------------------------------------------
def _bn_fold(keys, c, eps=1e-5):
    kg, kb, km, kv = keys
    gamma = 1.0 + 0.1 * jax.random.normal(kg, (c,), jnp.float32)
    beta = 0.1 * jax.random.normal(kb, (c,), jnp.float32)
    mean = 0.1 * jax.random.normal(km, (c,), jnp.float32)
    var = jnp.abs(jax.random.normal(kv, (c,), jnp.float32)) + 0.5
    scale = gamma / jnp.sqrt(var + eps)
    return scale, beta - mean * scale


def make_params(key, c_in, c_out):
    ch = c_in // 2
    ks = jax.random.split(key, 15)
    w_init = lambda k, shape, fan: (
        jax.random.normal(k, shape, jnp.float32) * (1.0 / fan) ** 0.5)
    bn_s, bn_b = _bn_fold(ks[1:5], ch)
    bn1_s, bn1_b = _bn_fold(ks[6:10], c_out)
    bn2_s, bn2_b = _bn_fold(ks[11:15], c_out)
    return {
        "up_w": w_init(ks[0], (c_in, ch, 2, 2), c_in * 4),   # ConvTranspose2d
        "bn_scale": bn_s, "bn_bias": bn_b,
        "conv1_w": w_init(ks[5], (c_out, c_in, 3, 3), c_in * 9),
        "bn1_scale": bn1_s, "bn1_bias": bn1_b,
        "conv2_w": w_init(ks[10], (c_out, c_out, 3, 3), c_out * 9),
        "bn2_scale": bn2_s, "bn2_bias": bn2_b,
    }


def _reference_forward(x_nchw, skip_nchw, p):
    """Pure-JAX f32 reference of the PyTorch UpBlock forward (eval-mode BN)."""
    N, _, H, W = x_nchw.shape
    ch = p["up_w"].shape[1]
    hi = jax.lax.Precision.HIGHEST
    t = jnp.einsum("nchw,ckij->nkhiwj", x_nchw, p["up_w"], precision=hi)
    up = t.reshape(N, ch, 2 * H, 2 * W)
    up = up * p["bn_scale"][None, :, None, None] + p["bn_bias"][None, :, None, None]
    up = jnp.maximum(up, 0.0)
    h = jnp.concatenate([up, skip_nchw], axis=1)

    def conv_bn_relu(h, w, s, b):
        y = jax.lax.conv_general_dilated(
            h, w, window_strides=(1, 1), padding=((1, 1), (1, 1)),
            dimension_numbers=("NCHW", "OIHW", "NCHW"), precision=hi)
        y = y * s[None, :, None, None] + b[None, :, None, None]
        return jnp.maximum(y, 0.0)

    h = conv_bn_relu(h, p["conv1_w"], p["bn1_scale"], p["bn1_bias"])
    h = conv_bn_relu(h, p["conv2_w"], p["bn2_scale"], p["bn2_bias"])
    return h


if __name__ == "__main__":
    key = jax.random.PRNGKey(0)
    N, c_in, c_out = 2, 32, 32
    H = W = 32                                  # input spatial; output is 64x64

    k_x, k_skip, k_p = jax.random.split(key, 3)
    x = jax.random.normal(k_x, (N, c_in, H, W), jnp.float32)              # NCHW
    skip = jax.random.normal(k_skip, (N, c_in // 2, 2 * H, 2 * W), jnp.float32)
    params = make_params(k_p, c_in, c_out)

    out = jax.block_until_ready(up_block_forward(x, skip, params))
    assert out.shape == (N, c_out, 2 * H, 2 * W), out.shape

    ref = jax.block_until_ready(_reference_forward(x, skip, params))
    err = float(jnp.max(jnp.abs(out - ref)))
    tol = 0.05 + 0.05 * float(jnp.max(jnp.abs(ref)))   # bf16 operands, f32 acc
    assert err <= tol, f"numerical mismatch: max|diff|={err:.4f} tol={tol:.4f}"
    print("KERNEL_OK")
</pallas_src>

<mosaic_0001>
module attributes {stable_mosaic.version = 11 : i64} {
  func.func @_upconv_kernel(%arg0: i32, %arg1: i32, %arg2: memref<1x8x32x32xbf16, #tpu.memory_space<vmem>>, %arg3: memref<32x64xbf16, #tpu.memory_space<vmem>>, %arg4: memref<1x64xf32, #tpu.memory_space<vmem>>, %arg5: memref<1x16x32x32xbf16, #tpu.memory_space<vmem>>) attributes {dimension_semantics = [#tpu.dimension_semantics<parallel>, #tpu.dimension_semantics<parallel>], iteration_bounds = array<i64: 2, 4>, scalar_prefetch = 0 : i64, scratch_operands = 0 : i64, tpu.core_type = #tpu.core_type<tc>, window_params = [{transform_indices = @transform_0, window_bounds = array<i64: 1, 8, 32, 32>}, {pipeline_mode = #tpu.pipeline_mode<synchronous>, transform_indices = @transform_1, window_bounds = array<i64: 32, 64>}, {pipeline_mode = #tpu.pipeline_mode<synchronous>, transform_indices = @transform_2, window_bounds = array<i64: 1, 64>}, {transform_indices = @transform_3, window_bounds = array<i64: 1, 16, 32, 32>}]} {
    %c0 = arith.constant 0 : index
    %c0_0 = arith.constant 0 : index
    %c0_1 = arith.constant 0 : index
    %c0_2 = arith.constant 0 : index
    %0 = vector.load %arg2[%c0, %c0_0, %c0_1, %c0_2] : memref<1x8x32x32xbf16, #tpu.memory_space<vmem>>, vector<1x8x32x32xbf16>
    %1 = vector.shape_cast %0 : vector<1x8x32x32xbf16> to vector<8x32x32xbf16>
    %2 = vector.shape_cast %1 : vector<8x32x32xbf16> to vector<256x32xbf16>
    %c0_3 = arith.constant 0 : index
    %c0_4 = arith.constant 0 : index
    %3 = vector.load %arg3[%c0_3, %c0_4] : memref<32x64xbf16, #tpu.memory_space<vmem>>, vector<32x64xbf16>
    %cst = arith.constant dense<0.000000e+00> : vector<256x64xf32>
    %4 = tpu.matmul %2, %3, %cst {dimension_numbers = #tpu.dot_dimension_numbers<[1], [0], [0], [1], [0, 0, 1, 1], [], []>} : vector<256x32xbf16>, vector<32x64xbf16>, vector<256x64xf32> -> vector<256x64xf32>
    %c0_5 = arith.constant 0 : index
    %c0_6 = arith.constant 0 : index
    %5 = vector.load %arg4[%c0_5, %c0_6] : memref<1x64xf32, #tpu.memory_space<vmem>>, vector<1x64xf32>
    %6 = vector.broadcast %5 : vector<1x64xf32> to vector<256x64xf32>
    %7 = arith.addf %4, %6 : vector<256x64xf32>
    %cst_7 = arith.constant 0.000000e+00 : f32
    %8 = vector.broadcast %cst_7 : f32 to vector<256x64xf32>
    %9 = arith.maximumf %7, %8 : vector<256x64xf32>
    %10 = vector.shape_cast %9 : vector<256x64xf32> to vector<8x32x64xf32>
    %11 = vector.extract_strided_slice %10 {offsets = [0, 0, 0], sizes = [8, 32, 32], strides = [1, 1, 1]} : vector<8x32x64xf32> to vector<8x32x32xf32>
    %12 = arith.truncf %11 : vector<8x32x32xf32> to vector<8x32x32xbf16>
    %13 = vector.extract_strided_slice %10 {offsets = [0, 0, 32], sizes = [8, 32, 32], strides = [1, 1, 1]} : vector<8x32x64xf32> to vector<8x32x32xf32>
    %14 = arith.truncf %13 : vector<8x32x32xf32> to vector<8x32x32xbf16>
    %15 = vector.shape_cast %12 : vector<8x32x32xbf16> to vector<8x1x32x32xbf16>
    %16 = vector.shape_cast %14 : vector<8x32x32xbf16> to vector<8x1x32x32xbf16>
    %17 = tpu.concatenate %15, %16 in 1 : vector<8x1x32x32xbf16>, vector<8x1x32x32xbf16> -> vector<8x2x32x32xbf16>
    %18 = vector.shape_cast %17 : vector<8x2x32x32xbf16> to vector<16x32x32xbf16>
    %c0_8 = arith.constant 0 : index
    %c0_9 = arith.constant 0 : index
    %c0_10 = arith.constant 0 : index
    %c0_11 = arith.constant 0 : index
    %19 = vector.load %arg5[%c0_8, %c0_9, %c0_10, %c0_11] : memref<1x16x32x32xbf16, #tpu.memory_space<vmem>>, vector<1x16x32x32xbf16>
    %20 = vector.shape_cast %19 : vector<1x16x32x32xbf16> to vector<16x32x32xbf16>
    %21 = vector.shape_cast %18 : vector<16x32x32xbf16> to vector<1x16x32x32xbf16>
    tpu.vector_store %arg5[%c0_8, %c0_9, %c0_10, %c0_11], %21 {strides = array<i32>} : memref<1x16x32x32xbf16, #tpu.memory_space<vmem>>, vector<1x16x32x32xbf16>,
    return
  }
  func.func @transform_0(%arg0: i32, %arg1: i32) -> (i32, i32, i32, i32) {
    %c0_i32 = arith.constant 0 : i32
    %c0_i32_0 = arith.constant 0 : i32
    %c0_i32_1 = arith.constant 0 : i32
    return %arg0, %arg1, %c0_i32, %c0_i32_0 : i32, i32, i32, i32
  }
  func.func @transform_1(%arg0: i32, %arg1: i32) -> (i32, i32) {
    %c0_i32 = arith.constant 0 : i32
    %c0_i32_0 = arith.constant 0 : i32
    %c0_i32_1 = arith.constant 0 : i32
    return %c0_i32, %c0_i32_0 : i32, i32
  }
  func.func @transform_2(%arg0: i32, %arg1: i32) -> (i32, i32) {
    %c0_i32 = arith.constant 0 : i32
    %c0_i32_0 = arith.constant 0 : i32
    %c0_i32_1 = arith.constant 0 : i32
    return %c0_i32, %c0_i32_0 : i32, i32
  }
  func.func @transform_3(%arg0: i32, %arg1: i32) -> (i32, i32, i32, i32) {
    %c0_i32 = arith.constant 0 : i32
    %c0_i32_0 = arith.constant 0 : i32
    %c0_i32_1 = arith.constant 0 : i32
    return %arg0, %arg1, %c0_i32, %c0_i32_0 : i32, i32, i32, i32
  }
}

</mosaic_0001>

<llo_original>
// kernel: tpu_custom_call.1
$region0: #{tpu_custom_call.1}
  #allocation0 [shape = 'u32[]', space=smem, size = 0x4, offset = 0x4, fixed_abs, tag = 'smem constant byte address 0x4 - core index']
  #allocation1 [shape = 'u32[72,128]{1,0:T(1,128)}', space=vmem, size = 0x9000, scoped, tag = 'internal scratch']
  %s0 = inlined_call_operand.hbm [shape: bf16[2,32,32,32], index: 0, kind: input, shape index: {}]
  %s1 = inlined_call_operand.hbm [shape: bf16[32,64], index: 1, kind: input, shape index: {}]
  %s2 = inlined_call_operand.vmem [shape: f32[1,64], index: 2, kind: input, shape index: {}]
  %s3 = inlined_call_operand.vmem [shape: bf16[2,64,32,32], index: 3, kind: output, shape index: {}]
  %s4 = sld [smem:[#allocation0]]
  $region53: #{tpu_custom_call.1} parent=0
    _
  %s6 = ssub.s32 1, %s4
  %s7 = scalar_select 0, %s6, %s4
  $region1: #{tpu_custom_call.1} parent=0
    #allocation2 [shape = 'u8[131072]{0}', space=vmem, size = 0x20000, scoped, tag = 'input window, operand 0']
    #allocation3 [shape = 's32[2]{0}', space=sflag, size = 0x8, scoped, tag = 'scoped memory for tpu_custom_call.1']
    #allocation4 [shape = 'u8[8192]{0}', space=vmem, size = 0x2000, scoped, tag = 'input window, operand 1, single buffered']
    #allocation5 [shape = 's32[1]{0}', space=sflag, size = 0x4, scoped, tag = 'scoped memory for tpu_custom_call.1']
    %8 = vsyncpa [#allocation3], 0
    %s9 = scalar_lea.sflag [#allocation3], 1
    %10 = vsyncpa %s9, 0
    %11 = vsyncpa [#allocation5], 0
    loop: start=0, step=1, limit=10
    $region2: #{tpu_custom_call.1} parent=1 // loop_pre_header
      _
    $region3: #{tpu_custom_call.1} parent=1 // loop_header
      %s13 = sphi 0, %s17
      %p14 = scmp.ge.s32.totalorder %s13, 10
      %s20 = sphi 0, %s32
      %s21 = sphi 0, %s28
      %s22 = sphi 0, %s20
      %s23 = sphi 0, %s21
      %s24 = sphi 0, %s22
      %s25 = sphi 0, %s23
      %s37 = sphi 0, %s39
      %s40 = sphi 0, %s37
      %s41 = sphi 0, %s40
      %s57 = sphi 0, %s41
      %s61 = sphi 0, %s61
      %s63 = sphi 0, %s61
      %s64 = sphi 0, %s63
      %s78 = sphi 0, %s64
      %s82 = sphi 0, %s82
      %s84 = sphi 0, %s82
      %s85 = sphi 0, %s84
      %s99 = sphi 0, %s85
      %s107 = sphi 0, %s109
      %s110 = sphi 0, %s107
      %s111 = sphi 0, %s110
      %s127 = sphi 0, %s111
    $region4: #{tpu_custom_call.1} parent=1 // loop_header_branch
      %16 = sbr.rel (%p14) target = $region8
    $region5: #{tpu_custom_call.1} parent=1 // loop_body
      %s18 = ssub.s32 %s13, 1
      %s19 = ssub.s32 %s13, 2
      %s26 = sadd.s32 1, %s21
      %p27 = scmp.ge.s32.totalorder %s26, 4
      %s28 = scalar_select %p27, 0, %s26
      %s29 = sadd.s32 1, %s20
      %s30 = scalar_select %p27, %s29, %s20
      %p31 = scmp.ge.s32.totalorder %s30, 2
      %s32 = scalar_select %p31, 0, %s30
      %s33 = ssub.s32 %s20, %s32
      %s34 = ssub.s32 %s21, %s28
      %s35 = sor.u32 %s33, %s34
      %p36 = scmp.eq.s32.totalorder %s35, 0
      %s38 = sadd.s32 %s37, 1
      %s39 = scalar_select %p36, %s37, %s38
      %p42 = pneg %p36
      %p43 = scmp.eq.s32.totalorder %s13, 7
      %p44 = por %p42, %p43
      %p45 = scmp.ne.s32.totalorder %s37, %s40
      %p46 = scmp.eq.s32.totalorder %s13, 0
      %p47 = por %p45, %p46
      %p48 = scmp.ne.s32.totalorder %s37, %s40
      %p49 = scmp.eq.s32.totalorder %s18, 7
      %p50 = por %p48, %p49
      %p51 = scmp.ne.s32.totalorder %s40, %s41
      %p52 = scmp.eq.s32.totalorder %s18, 0
      %p53 = por %p51, %p52
      %p54 = scmp.ne.s32.totalorder %s40, %s41
      %p55 = scmp.eq.s32.totalorder %s19, 7
      %p56 = por %p54, %p55
      %p58 = scmp.ne.s32.totalorder %s41, %s57
      %p59 = scmp.eq.s32.totalorder %s19, 0
      %p60 = por %p58, %p59
      %s62 = sadd.s32 %s61, 1
      %p65 = scmp.eq.s32.totalorder %s13, 7
      %p66 = scmp.ne.s32.totalorder %s61, %s63
      %p67 = scmp.eq.s32.totalorder %s13, 0
      %p68 = por %p66, %p67
      %p69 = scmp.ne.s32.totalorder %s61, %s63
      %p70 = scmp.eq.s32.totalorder %s18, 7
      %p71 = por %p69, %p70
      %p72 = scmp.ne.s32.totalorder %s63, %s64
      %p73 = scmp.eq.s32.totalorder %s18, 0
      %p74 = por %p72, %p73
      %p75 = scmp.ne.s32.totalorder %s63, %s64
      %p76 = scmp.eq.s32.totalorder %s19, 7
      %p77 = por %p75, %p76
      %p79 = scmp.ne.s32.totalorder %s64, %s78
      %p80 = scmp.eq.s32.totalorder %s19, 0
      %p81 = por %p79, %p80
      %s83 = sadd.s32 %s82, 1
      %p86 = scmp.eq.s32.totalorder %s13, 7
      %p87 = scmp.ne.s32.totalorder %s82, %s84
      %p88 = scmp.eq.s32.totalorder %s13, 0
      %p89 = por %p87, %p88
      %p90 = scmp.ne.s32.totalorder %s82, %s84
      %p91 = scmp.eq.s32.totalorder %s18, 7
      %p92 = por %p90, %p91
      %p93 = scmp.ne.s32.totalorder %s84, %s85
      %p94 = scmp.eq.s32.totalorder %s18, 0
      %p95 = por %p93, %p94
      %p96 = scmp.ne.s32.totalorder %s84, %s85
      %p97 = scmp.eq.s32.totalorder %s19, 7
      %p98 = por %p96, %p97
      %p100 = scmp.ne.s32.totalorder %s85, %s99
      %p101 = scmp.eq.s32.totalorder %s19, 0
      %p102 = por %p100, %p101
      %s103 = ssub.s32 %s20, %s32
      %s104 = ssub.s32 %s21, %s28
      %s105 = sor.u32 %s103, %s104
      %p106 = scmp.eq.s32.totalorder %s105, 0
      %s108 = sadd.s32 %s107, 1
      %s109 = scalar_select %p106, %s107, %s108
      %p112 = pneg %p106
      %p113 = scmp.eq.s32.totalorder %s13, 7
      %p114 = por %p112, %p113
      %p115 = scmp.ne.s32.totalorder %s107, %s110
      %p116 = scmp.eq.s32.totalorder %s13, 0
      %p117 = por %p115, %p116
      %p118 = scmp.ne.s32.totalorder %s107, %s110
      %p119 = scmp.eq.s32.totalorder %s18, 7
      %p120 = por %p118, %p119
      %p121 = scmp.ne.s32.totalorder %s110, %s111
      %p122 = scmp.eq.s32.totalorder %s18, 0
      %p123 = por %p121, %p122
      %p124 = scmp.ne.s32.totalorder %s110, %s111
      %p125 = scmp.eq.s32.totalorder %s19, 7
      %p126 = por %p124, %p125
      %p128 = scmp.ne.s32.totalorder %s111, %s127
      %p129 = scmp.eq.s32.totalorder %s19, 0
      %p130 = por %p128, %p129
      %p131 = scmp.le.s32.totalorder 1, %s13
      %p132 = scmp.lt.s32.totalorder %s13, 9
      %p133 = pnand %p131, %p132
      %p134 = pneg %p133
      // Predicated region
      $region9: #{tpu_custom_call.1} parent=5 // pred_check
        _
      $region10: #{tpu_custom_call.1} parent=5 // pred_check_branch
        %136 = sbr.rel (%p133) target = $region12
      $region11: #{tpu_custom_call.1} parent=5 // pred_region
        %s137 = ssub.s32 %s13, 1
        // Predicated region
        $region13: #{tpu_custom_call.1} parent=11 // pred_check
          %p138 = pneg %p74
        $region14: #{tpu_custom_call.1} parent=11 // pred_check_branch
          %140 = sbr.rel (%p138) target = $region16
        $region15: #{tpu_custom_call.1} parent=11 // pred_region
          %142 = vsyncadd [#allocation5], 0
          %s143 = sshll.u32 %s1, 4
          %s144 = int_to_ptr.hbm [resolvable:$true] %s143
          %s145 = sshll.u32 [#allocation4], 4
          %s146 = int_to_ptr.vmem [resolvable:$true] %s145
          %151 = dma.hbm_to_vmem [thread:$0]  %s144, 256, %s146, [#allocation5], 64, 64, 4
        $region16: #{tpu_custom_call.1} parent=11 // pred_fallthru
          _
        // Predicated region
        $region17: #{tpu_custom_call.1} parent=11 // pred_check
          %p152 = pneg %p95
        $region18: #{tpu_custom_call.1} parent=11 // pred_check_branch
          %154 = sbr.rel (%p152) target = $region20
        $region19: #{tpu_custom_call.1} parent=11 // pred_region
          _
        $region20: #{tpu_custom_call.1} parent=11 // pred_fallthru
          _
      $region12: #{tpu_custom_call.1} parent=5 // pred_fallthru
        _
      %p155 = scmp.lt.s32.totalorder %s13, 8
      // Predicated region
      $region21: #{tpu_custom_call.1} parent=5 // pred_check
        %p156 = pneg %p155
      $region22: #{tpu_custom_call.1} parent=5 // pred_check_branch
        %158 = sbr.rel (%p156) target = $region24
      $region23: #{tpu_custom_call.1} parent=5 // pred_region
        // Predicated region
        $region25: #{tpu_custom_call.1} parent=23 // pred_check
          %p159 = pneg %p47
        $region26: #{tpu_custom_call.1} parent=23 // pred_check_branch
          %161 = sbr.rel (%p159) target = $region28
        $region27: #{tpu_custom_call.1} parent=23 // pred_region
          %s162 = sand.u32 %s37, 1
          %s163 = scalar_lea.sflag [#allocation3], %s162
          %s164 = sand.u32 %s37, 1
          %s165 = smul.addr %s164, 128
          %s166 = scalar_lea.vmem [#allocation2], %s165
          %s167 = smul.u32 8, %s21
          %169 = vsyncadd %s163, 0
          %s170 = smul.addr %s167, 4
          %s171 = smul.addr %s20, 128
          %s172 = sadd.s32 %s170, %s171
          %s173 = smul.addr %s172, 4
          %s174 = scalar_lea.hbm %s0, %s173
          %s175 = sshll.u32 %s174, 4
          %s176 = int_to_ptr.hbm [resolvable:$true] %s175
          %s177 = sshll.u32 %s166, 4
          %s178 = int_to_ptr.vmem [resolvable:$true] %s177
          %183 = dma.hbm_to_vmem [thread:$0]  %s176, 2048, %s178, %s163, 64, 64, 4
        $region28: #{tpu_custom_call.1} parent=23 // pred_fallthru
          _
      $region24: #{tpu_custom_call.1} parent=5 // pred_fallthru
        _
      %p184 = scmp.le.s32.totalorder 1, %s13
      %p185 = scmp.lt.s32.totalorder %s13, 9
      %p186 = pnand %p184, %p185
      %p187 = pneg %p186
      // Predicated region
      $region29: #{tpu_custom_call.1} parent=5 // pred_check
        _
      $region30: #{tpu_custom_call.1} parent=5 // pred_check_branch
        %189 = sbr.rel (%p186) target = $region32
      $region31: #{tpu_custom_call.1} parent=5 // pred_region
        %s190 = ssub.s32 %s13, 1
        %s191 = sand.u32 %s40, 1
        %s192 = scalar_lea.sflag [#allocation3], %s191
        %s193 = sand.u32 %s40, 1
        %s194 = smul.addr %s193, 128
        %s195 = scalar_lea.vmem [#allocation2], %s194
        // Predicated region
        $region33: #{tpu_custom_call.1} parent=31 // pred_check
          %p196 = pneg %p53
        $region34: #{tpu_custom_call.1} parent=31 // pred_check_branch
          %198 = sbr.rel (%p196) target = $region36
        $region35: #{tpu_custom_call.1} parent=31 // pred_region
          %200 = dma.done %s192, 2048
        $region36: #{tpu_custom_call.1} parent=31 // pred_fallthru
          _
        // Predicated region
        $region37: #{tpu_custom_call.1} parent=31 // pred_check
          %p201 = pneg %p74
        $region38: #{tpu_custom_call.1} parent=31 // pred_check_branch
          %203 = sbr.rel (%p201) target = $region40
        $region39: #{tpu_custom_call.1} parent=31 // pred_region
          %205 = dma.done [#allocation5], 256
        $region40: #{tpu_custom_call.1} parent=31 // pred_fallthru
          _
        %s206 = sand.u32 %s40, 1
        %s207 = scalar_lea.sflag [#allocation3], %s206
        %s208 = sand.u32 %s40, 1
        %s209 = smul.addr %s208, 128
        %s210 = scalar_lea.vmem [#allocation2], %s209
        %p211 = pneg %p53
        %p212 = pneg %p50
        %p213 = pneg %p74
        %p214 = pneg %p71
        %p215 = pneg %p95
        %p216 = pneg %p92
        %p217 = pneg %p123
        %p218 = pneg %p120
        %s219 = smul.u32 16, %s23
        %p220 = scmp.lt.s32.totalorder %s22, 1
        %s221 = scalar_select %p220, %s22, 1
        %p222 = scmp.lt.s32.totalorder %s219, 63
        %s223 = scalar_select %p222, %s219, 63
        %s224 = smul.addr %s223, 4
        %s225 = smul.addr %s221, 256
        %s226 = sadd.s32 %s224, %s225
        %s227 = smul.addr %s226, 4
        %s228 = scalar_lea.vmem %s3, %s227
        %s229 = smul.u32 8, %s23
        %s230 = smul.u32 16, %s23
        %p231 = scmp.lt.s32.totalorder %s22, 1
        %s232 = scalar_select %p231, %s22, 1
        %p233 = scmp.lt.s32.totalorder %s230, 63
        %s234 = scalar_select %p233, %s230, 63
        %s235 = smul.addr %s234, 4
        %s236 = smul.addr %s232, 256
        %s237 = sadd.s32 %s235, %s236
        %s238 = smul.addr %s237, 4
        %s239 = scalar_lea.vmem %s3, %s238
        %s240 = smul.u32 16, %s23
        %v242 = vld [vmem:[%s195] sm:$0xf]
        %v243 = vld [vmem:[%s195 + $0x4] sm:$0xf]
        %v244 = vld [vmem:[%s195 + $0x8] sm:$0xf]
        %v245 = vld [vmem:[%s195 + $0xc] sm:$0xf]
        %v246 = vld [vmem:[%s195 + $0x10] sm:$0xf]
        %v247 = vld [vmem:[%s195 + $0x14] sm:$0xf]
        %v248 = vld [vmem:[%s195 + $0x18] sm:$0xf]
        %v249 = vld [vmem:[%s195 + $0x1c] sm:$0xf]
        %v250 = vld [vmem:[%s195 + $0x20] sm:$0xf]
        %v251 = vld [vmem:[%s195 + $0x24] sm:$0xf]
        %v252 = vld [vmem:[%s195 + $0x28] sm:$0xf]
        %v253 = vld [vmem:[%s195 + $0x2c] sm:$0xf]
        %v254 = vld [vmem:[%s195 + $0x30] sm:$0xf]
        %v255 = vld [vmem:[%s195 + $0x34] sm:$0xf]
        %v256 = vld [vmem:[%s195 + $0x38] sm:$0xf]
        %v257 = vld [vmem:[%s195 + $0x3c] sm:$0xf]
        %v258 = vld [vmem:[%s195 + $0x40] sm:$0xf]
        %v259 = vld [vmem:[%s195 + $0x44] sm:$0xf]
        %v260 = vld [vmem:[%s195 + $0x48] sm:$0xf]
        %v261 = vld [vmem:[%s195 + $0x4c] sm:$0xf]
        %v262 = vld [vmem:[%s195 + $0x50] sm:$0xf]
        %v263 = vld [vmem:[%s195 + $0x54] sm:$0xf]
        %v264 = vld [vmem:[%s195 + $0x58] sm:$0xf]
        %v265 = vld [vmem:[%s195 + $0x5c] sm:$0xf]
        %v266 = vld [vmem:[%s195 + $0x60] sm:$0xf]
        %v267 = vld [vmem:[%s195 + $0x64] sm:$0xf]
        %v268 = vld [vmem:[%s195 + $0x68] sm:$0xf]
        %v269 = vld [vmem:[%s195 + $0x6c] sm:$0xf]
        %v270 = vld [vmem:[%s195 + $0x70] sm:$0xf]
        %v271 = vld [vmem:[%s195 + $0x74] sm:$0xf]
        %v272 = vld [vmem:[%s195 + $0x78] sm:$0xf]
        %v273 = vld [vmem:[%s195 + $0x7c] sm:$0xf]
        %v274 = vld [vmem:[#allocation4] sm:$0xf]
        %v275 = vld [vmem:[#allocation4 + $0x4] sm:$0xf]
        %v276 = vld [vmem:[#allocation4 + $0x8] sm:$0xf]
        %v277 = vld [vmem:[#allocation4 + $0xc] sm:$0xf]
        %v278 = vld [vmem:[%s2] sm:$0x1]
        %v280 = vperm.slane %v278, 0
        %v314 = vunpack.c.l.b16 %v242
        %v315 = vunpack.c.l.b16 %v243
        %v316 = vunpack.c.l.b16 %v244
        %v317 = vunpack.c.l.b16 %v245
        %v318 = vunpack.c.l.b16 %v246
        %v319 = vunpack.c.l.b16 %v247
        %v320 = vunpack.c.l.b16 %v248
        %v321 = vunpack.c.l.b16 %v249
        %v322 = vunpack.c.l.b16 %v250
        %v323 = vunpack.c.l.b16 %v251
        %v324 = vunpack.c.l.b16 %v252
        %v325 = vunpack.c.l.b16 %v253
        %v326 = vunpack.c.l.b16 %v254
        %v327 = vunpack.c.l.b16 %v255
        %v328 = vunpack.c.l.b16 %v256
        %v329 = vunpack.c.l.b16 %v257
        %v330 = vunpack.c.l.b16 %v258
        %v331 = vunpack.c.l.b16 %v259
        %v332 = vunpack.c.l.b16 %v260
        %v333 = vunpack.c.l.b16 %v261
        %v334 = vunpack.c.l.b16 %v262
        %v335 = vunpack.c.l.b16 %v263
        %v336 = vunpack.c.l.b16 %v264
        %v337 = vunpack.c.l.b16 %v265
        %v338 = vunpack.c.l.b16 %v266
        %v339 = vunpack.c.l.b16 %v267
        %v340 = vunpack.c.l.b16 %v268
        %v341 = vunpack.c.l.b16 %v269
        %v342 = vunpack.c.l.b16 %v270
        %v343 = vunpack.c.l.b16 %v271
        %v344 = vunpack.c.l.b16 %v272
        %v345 = vunpack.c.l.b16 %v273
        %v346 = vpack.c.b16 %v315, %v314
        %v347 = vpack.c.b16 %v317, %v316
        %v348 = vpack.c.b16 %v319, %v318
        %v349 = vpack.c.b16 %v321, %v320
        %v350 = vpack.c.b16 %v323, %v322
        %v351 = vpack.c.b16 %v325, %v324
        %v352 = vpack.c.b16 %v327, %v326
        %v353 = vpack.c.b16 %v329, %v328
        %v354 = vpack.c.b16 %v331, %v330
        %v355 = vpack.c.b16 %v333, %v332
        %v356 = vpack.c.b16 %v335, %v334
        %v357 = vpack.c.b16 %v337, %v336
        %v358 = vpack.c.b16 %v339, %v338
        %v359 = vpack.c.b16 %v341, %v340
        %v360 = vpack.c.b16 %v343, %v342
        %v361 = vpack.c.b16 %v345, %v344
        %v366 = vunpack.c.l.b16 %v274
        %v367 = vunpack.c.l.b16 %v275
        %v368 = vunpack.c.l.b16 %v276
        %v369 = vunpack.c.l.b16 %v277
        %v370 = vpack.c.b16 %v367, %v366
        %v371 = vpack.c.b16 %v369, %v368
        %vm374 = vcmask 261120
        %v376 = vsel %vm374, %v346, 0
        %v379 = vsel %vm374, %v347, 0
        %v382 = vsel %vm374, %v348, 0
        %v385 = vsel %vm374, %v349, 0
        %v388 = vsel %vm374, %v350, 0
        %v391 = vsel %vm374, %v351, 0
        %v394 = vsel %vm374, %v352, 0
        %v397 = vsel %vm374, %v353, 0
        %v400 = vsel %vm374, %v354, 0
        %v403 = vsel %vm374, %v355, 0
        %v406 = vsel %vm374, %v356, 0
        %v409 = vsel %vm374, %v357, 0
        %v412 = vsel %vm374, %v358, 0
        %v415 = vsel %vm374, %v359, 0
        %v418 = vsel %vm374, %v360, 0
        %v421 = vsel %vm374, %v361, 0
        %423 = vmatpush.bf16.msra.mxu0 0
        %424 = vmatpush.bf16.msra.mxu0 0
        %425 = vmatpush.bf16.msra.mxu0 0
        %426 = vmatpush.bf16.msra.mxu0 0
        %427 = vmatpush.bf16.msra.mxu0 0
        %428 = vmatpush.bf16.msra.mxu0 0
        %429 = vmatpush.bf16.msra.mxu0 %v371
        %430 = vmatpush.bf16.msra.mxu0 %v370
        %431 = vmatmul.bf16.gmra.mxu0 %v376
        %v432 = vpop.f32.mrf.mxu0
        %v433 = vadd.f32 %v280, %v432
        %v434 = vpop.f32.mrf.mxu0
        %v435 = vadd.f32 %v280, %v434
        %436 = vmatmul.bf16.gmra.mxu0 %v379
        %v437 = vpop.f32.mrf.mxu0
        %v438 = vadd.f32 %v280, %v437
        %v439 = vpop.f32.mrf.mxu0
        %v440 = vadd.f32 %v280, %v439
        %441 = vmatmul.bf16.gmra.mxu0 %v382
        %v442 = vpop.f32.mrf.mxu0
        %v443 = vadd.f32 %v280, %v442
        %v444 = vpop.f32.mrf.mxu0
        %v445 = vadd.f32 %v280, %v444
        %446 = vmatmul.bf16.gmra.mxu0 %v385
        %v447 = vpop.f32.mrf.mxu0
        %v448 = vadd.f32 %v280, %v447
        %v449 = vpop.f32.mrf.mxu0
        %v450 = vadd.f32 %v280, %v449
        %451 = vmatmul.bf16.gmra.mxu0 %v388
        %v452 = vpop.f32.mrf.mxu0
        %v453 = vadd.f32 %v280, %v452
        %v454 = vpop.f32.mrf.mxu0
        %v455 = vadd.f32 %v280, %v454
        %456 = vmatmul.bf16.gmra.mxu0 %v391
        %v457 = vpop.f32.mrf.mxu0
        %v458 = vadd.f32 %v280, %v457
        %v459 = vpop.f32.mrf.mxu0
        %v460 = vadd.f32 %v280, %v459
        %461 = vmatmul.bf16.gmra.mxu0 %v394
        %v462 = vpop.f32.mrf.mxu0
        %v463 = vadd.f32 %v280, %v462
        %v464 = vpop.f32.mrf.mxu0
        %v465 = vadd.f32 %v280, %v464
        %466 = vmatmul.bf16.gmra.mxu0 %v397
        %v467 = vpop.f32.mrf.mxu0
        %v468 = vadd.f32 %v280, %v467
        %v469 = vpop.f32.mrf.mxu0
        %v470 = vadd.f32 %v280, %v469
        %471 = vmatmul.bf16.gmra.mxu0 %v400
        %v472 = vpop.f32.mrf.mxu0
        %v473 = vadd.f32 %v280, %v472
        %v474 = vpop.f32.mrf.mxu0
        %v475 = vadd.f32 %v280, %v474
        %476 = vmatmul.bf16.gmra.mxu0 %v403
        %v477 = vpop.f32.mrf.mxu0
        %v478 = vadd.f32 %v280, %v477
        %v479 = vpop.f32.mrf.mxu0
        %v480 = vadd.f32 %v280, %v479
        %481 = vmatmul.bf16.gmra.mxu0 %v406
        %v482 = vpop.f32.mrf.mxu0
        %v483 = vadd.f32 %v280, %v482
        %v484 = vpop.f32.mrf.mxu0
        %v485 = vadd.f32 %v280, %v484
        %486 = vmatmul.bf16.gmra.mxu0 %v409
        %v487 = vpop.f32.mrf.mxu0
        %v488 = vadd.f32 %v280, %v487
        %v489 = vpop.f32.mrf.mxu0
        %v490 = vadd.f32 %v280, %v489
        %491 = vmatmul.bf16.gmra.mxu0 %v412
        %v492 = vpop.f32.mrf.mxu0
        %v493 = vadd.f32 %v280, %v492
        %v494 = vpop.f32.mrf.mxu0
        %v495 = vadd.f32 %v280, %v494
        %496 = vmatmul.bf16.gmra.mxu0 %v415
        %v497 = vpop.f32.mrf.mxu0
        %v498 = vadd.f32 %v280, %v497
        %v499 = vpop.f32.mrf.mxu0
        %v500 = vadd.f32 %v280, %v499
        %501 = vmatmul.bf16.gmra.mxu0 %v418
        %v502 = vpop.f32.mrf.mxu0
        %v503 = vadd.f32 %v280, %v502
        %v504 = vpop.f32.mrf.mxu0
        %v505 = vadd.f32 %v280, %v504
        %506 = vmatmul.bf16.gmra.mxu0 %v421
        %v507 = vpop.f32.mrf.mxu0
        %v508 = vadd.f32 %v280, %v507
        %v509 = vpop.f32.mrf.mxu0
        %v510 = vadd.f32 %v280, %v509
        %511 = vdwg.mxu0
        %v512 = vmax.f32 %v433, 0.0
        %v513 = vmax.f32 %v435, 0.0
        %v514 = vmax.f32 %v438, 0.0
        %v515 = vmax.f32 %v440, 0.0
        %v516 = vmax.f32 %v443, 0.0
        %v517 = vmax.f32 %v445, 0.0
        %v518 = vmax.f32 %v448, 0.0
        %v519 = vmax.f32 %v450, 0.0
        %v520 = vmax.f32 %v453, 0.0
        %v521 = vmax.f32 %v455, 0.0
        %v522 = vmax.f32 %v458, 0.0
        %v523 = vmax.f32 %v460, 0.0
        %v524 = vmax.f32 %v463, 0.0
        %v525 = vmax.f32 %v465, 0.0
        %v526 = vmax.f32 %v468, 0.0
        %v527 = vmax.f32 %v470, 0.0
        %v528 = vmax.f32 %v473, 0.0
        %v529 = vmax.f32 %v475, 0.0
        %v530 = vmax.f32 %v478, 0.0
        %v531 = vmax.f32 %v480, 0.0
        %v532 = vmax.f32 %v483, 0.0
        %v533 = vmax.f32 %v485, 0.0
        %v534 = vmax.f32 %v488, 0.0
        %v535 = vmax.f32 %v490, 0.0
        %v536 = vmax.f32 %v493, 0.0
        %v537 = vmax.f32 %v495, 0.0
        %v538 = vmax.f32 %v498, 0.0
        %v539 = vmax.f32 %v500, 0.0
        %v540 = vmax.f32 %v503, 0.0
        %v541 = vmax.f32 %v505, 0.0
        %v542 = vmax.f32 %v508, 0.0
        %v543 = vmax.f32 %v510, 0.0
        %v544 = vpack.c.bf16 %v512, %v512
        %v545 = vpack.c.bf16 %v513, %v513
        %v546 = vpack.c.bf16 %v514, %v514
        %v547 = vpack.c.bf16 %v515, %v515
        %v548 = vpack.c.bf16 %v516, %v516
        %v549 = vpack.c.bf16 %v517, %v517
        %v550 = vpack.c.bf16 %v518, %v518
        %v551 = vpack.c.bf16 %v519, %v519
        %v552 = vpack.c.bf16 %v520, %v520
        %v553 = vpack.c.bf16 %v521, %v521
        %v554 = vpack.c.bf16 %v522, %v522
        %v555 = vpack.c.bf16 %v523, %v523
        %v556 = vpack.c.bf16 %v524, %v524
        %v557 = vpack.c.bf16 %v525, %v525
        %v558 = vpack.c.bf16 %v526, %v526
        %v559 = vpack.c.bf16 %v527, %v527
        %v560 = vpack.c.bf16 %v528, %v528
        %v561 = vpack.c.bf16 %v529, %v529
        %v562 = vpack.c.bf16 %v530, %v530
        %v563 = vpack.c.bf16 %v531, %v531
        %v564 = vpack.c.bf16 %v532, %v532
        %v565 = vpack.c.bf16 %v533, %v533
        %v566 = vpack.c.bf16 %v534, %v534
        %v567 = vpack.c.bf16 %v535, %v535
        %v568 = vpack.c.bf16 %v536, %v536
        %v569 = vpack.c.bf16 %v537, %v537
        %v570 = vpack.c.bf16 %v538, %v538
        %v571 = vpack.c.bf16 %v539, %v539
        %v572 = vpack.c.bf16 %v540, %v540
        %v573 = vpack.c.bf16 %v541, %v541
        %v574 = vpack.c.bf16 %v542, %v542
        %v575 = vpack.c.bf16 %v543, %v543
        %608 = vrot.lane.b32.xlu0 %v544, 96
        %v609 = vpop.permute.xlu0 %608
        %610 = vrot.lane.b32.xlu0 %v545, 96
        %v611 = vpop.permute.xlu0 %610
        %612 = vrot.lane.b32.xlu0 %v546, 96
        %v613 = vpop.permute.xlu0 %612
        %614 = vrot.lane.b32.xlu0 %v547, 96
        %v615 = vpop.permute.xlu0 %614
        %616 = vrot.lane.b32.xlu0 %v548, 96
        %v617 = vpop.permute.xlu0 %616
        %618 = vrot.lane.b32.xlu0 %v549, 96
        %v619 = vpop.permute.xlu0 %618
        %620 = vrot.lane.b32.xlu0 %v550, 96
        %v621 = vpop.permute.xlu0 %620
        %622 = vrot.lane.b32.xlu0 %v551, 96
        %v623 = vpop.permute.xlu0 %622
        %624 = vrot.lane.b32.xlu0 %v552, 96
        %v625 = vpop.permute.xlu0 %624
        %626 = vrot.lane.b32.xlu0 %v553, 96
        %v627 = vpop.permute.xlu0 %626
        %628 = vrot.lane.b32.xlu0 %v554, 96
        %v629 = vpop.permute.xlu0 %628
        %630 = vrot.lane.b32.xlu0 %v555, 96
        %v631 = vpop.permute.xlu0 %630
        %632 = vrot.lane.b32.xlu0 %v556, 96
        %v633 = vpop.permute.xlu0 %632
        %634 = vrot.lane.b32.xlu0 %v557, 96
        %v635 = vpop.permute.xlu0 %634
        %636 = vrot.lane.b32.xlu0 %v558, 96
        %v637 = vpop.permute.xlu0 %636
        %638 = vrot.lane.b32.xlu0 %v559, 96
        %v639 = vpop.permute.xlu0 %638
        %640 = vrot.lane.b32.xlu0 %v560, 96
        %v641 = vpop.permute.xlu0 %640
        %642 = vrot.lane.b32.xlu0 %v561, 96
        %v643 = vpop.permute.xlu0 %642
        %644 = vrot.lane.b32.xlu0 %v562, 96
        %v645 = vpop.permute.xlu0 %644
        %646 = vrot.lane.b32.xlu0 %v563, 96
        %v647 = vpop.permute.xlu0 %646
        %648 = vrot.lane.b32.xlu0 %v564, 96
        %v649 = vpop.permute.xlu0 %648
        %650 = vrot.lane.b32.xlu0 %v565, 96
        %v651 = vpop.permute.xlu0 %650
        %652 = vrot.lane.b32.xlu0 %v566, 96
        %v653 = vpop.permute.xlu0 %652
        %654 = vrot.lane.b32.xlu0 %v567, 96
        %v655 = vpop.permute.xlu0 %654
        %656 = vrot.lane.b32.xlu0 %v568, 96
        %v657 = vpop.permute.xlu0 %656
        %658 = vrot.lane.b32.xlu0 %v569, 96
        %v659 = vpop.permute.xlu0 %658
        %660 = vrot.lane.b32.xlu0 %v570, 96
        %v661 = vpop.permute.xlu0 %660
        %662 = vrot.lane.b32.xlu0 %v571, 96
        %v663 = vpop.permute.xlu0 %662
        %664 = vrot.lane.b32.xlu0 %v572, 96
        %v665 = vpop.permute.xlu0 %664
        %666 = vrot.lane.b32.xlu0 %v573, 96
        %v667 = vpop.permute.xlu0 %666
        %668 = vrot.lane.b32.xlu0 %v574, 96
        %v669 = vpop.permute.xlu0 %668
        %670 = vrot.lane.b32.xlu0 %v575, 96
        %v671 = vpop.permute.xlu0 %670
        %vm704 = vcmask 257024
        %705 = vst.msk [vmem:[%s239] sm:$0xf] %vm704, %v544
        %706 = vst.msk [vmem:[%s239 + $0x4] sm:$0xf] %vm704, %v545
        %707 = vst.msk [vmem:[%s239 + $0x8] sm:$0xf] %vm704, %v546
        %708 = vst.msk [vmem:[%s239 + $0xc] sm:$0xf] %vm704, %v547
        %709 = vst.msk [vmem:[%s239 + $0x10] sm:$0xf] %vm704, %v609
        %710 = vst.msk [vmem:[%s239 + $0x14] sm:$0xf] %vm704, %v611
        %711 = vst.msk [vmem:[%s239 + $0x18] sm:$0xf] %vm704, %v613
        %712 = vst.msk [vmem:[%s239 + $0x1c] sm:$0xf] %vm704, %v615
        %713 = vst.msk [vmem:[%s239 + $0x20] sm:$0xf] %vm704, %v548
        %714 = vst.msk [vmem:[%s239 + $0x24] sm:$0xf] %vm704, %v549
        %715 = vst.msk [vmem:[%s239 + $0x28] sm:$0xf] %vm704, %v550
        %716 = vst.msk [vmem:[%s239 + $0x2c] sm:$0xf] %vm704, %v551
        %717 = vst.msk [vmem:[%s239 + $0x30] sm:$0xf] %vm704, %v617
        %718 = vst.msk [vmem:[%s239 + $0x34] sm:$0xf] %vm704, %v619
        %719 = vst.msk [vmem:[%s239 + $0x38] sm:$0xf] %vm704, %v621
        %720 = vst.msk [vmem:[%s239 + $0x3c] sm:$0xf] %vm704, %v623
        %721 = vst.msk [vmem:[%s239 + $0x40] sm:$0xf] %vm704, %v552
        %722 = vst.msk [vmem:[%s239 + $0x44] sm:$0xf] %vm704, %v553
        %723 = vst.msk [vmem:[%s239 + $0x48] sm:$0xf] %vm704, %v554
        %724 = vst.msk [vmem:[%s239 + $0x4c] sm:$0xf] %vm704, %v555
        %725 = vst.msk [vmem:[%s239 + $0x50] sm:$0xf] %vm704, %v625
        %726 = vst.msk [vmem:[%s239 + $0x54] sm:$0xf] %vm704, %v627
        %727 = vst.msk [vmem:[%s239 + $0x58] sm:$0xf] %vm704, %v629
        %728 = vst.msk [vmem:[%s239 + $0x5c] sm:$0xf] %vm704, %v631
        %729 = vst.msk [vmem:[%s239 + $0x60] sm:$0xf] %vm704, %v556
        %730 = vst.msk [vmem:[%s239 + $0x64] sm:$0xf] %vm704, %v557
        %731 = vst.msk [vmem:[%s239 + $0x68] sm:$0xf] %vm704, %v558
        %732 = vst.msk [vmem:[%s239 + $0x6c] sm:$0xf] %vm704, %v559
        %733 = vst.msk [vmem:[%s239 + $0x70] sm:$0xf] %vm704, %v633
        %734 = vst.msk [vmem:[%s239 + $0x74] sm:$0xf] %vm704, %v635
        %735 = vst.msk [vmem:[%s239 + $0x78] sm:$0xf] %vm704, %v637
        %736 = vst.msk [vmem:[%s239 + $0x7c] sm:$0xf] %vm704, %v639
        %737 = vst.msk [vmem:[%s239 + $0x80] sm:$0xf] %vm704, %v560
        %738 = vst.msk [vmem:[%s239 + $0x84] sm:$0xf] %vm704, %v561
        %739 = vst.msk [vmem:[%s239 + $0x88] sm:$0xf] %vm704, %v562
        %740 = vst.msk [vmem:[%s239 + $0x8c] sm:$0xf] %vm704, %v563
        %741 = vst.msk [vmem:[%s239 + $0x90] sm:$0xf] %vm704, %v641
        %742 = vst.msk [vmem:[%s239 + $0x94] sm:$0xf] %vm704, %v643
        %743 = vst.msk [vmem:[%s239 + $0x98] sm:$0xf] %vm704, %v645
        %744 = vst.msk [vmem:[%s239 + $0x9c] sm:$0xf] %vm704, %v647
        %745 = vst.msk [vmem:[%s239 + $0xa0] sm:$0xf] %vm704, %v564
        %746 = vst.msk [vmem:[%s239 + $0xa4] sm:$0xf] %vm704, %v565
        %747 = vst.msk [vmem:[%s239 + $0xa8] sm:$0xf] %vm704, %v566
        %748 = vst.msk [vmem:[%s239 + $0xac] sm:$0xf] %vm704, %v567
        %749 = vst.msk [vmem:[%s239 + $0xb0] sm:$0xf] %vm704, %v649
        %750 = vst.msk [vmem:[%s239 + $0xb4] sm:$0xf] %vm704, %v651
        %751 = vst.msk [vmem:[%s239 + $0xb8] sm:$0xf] %vm704, %v653
        %752 = vst.msk [vmem:[%s239 + $0xbc] sm:$0xf] %vm704, %v655
        %753 = vst.msk [vmem:[%s239 + $0xc0] sm:$0xf] %vm704, %v568
        %754 = vst.msk [vmem:[%s239 + $0xc4] sm:$0xf] %vm704, %v569
        %755 = vst.msk [vmem:[%s239 + $0xc8] sm:$0xf] %vm704, %v570
        %756 = vst.msk [vmem:[%s239 + $0xcc] sm:$0xf] %vm704, %v571
        %757 = vst.msk [vmem:[%s239 + $0xd0] sm:$0xf] %vm704, %v657
        %758 = vst.msk [vmem:[%s239 + $0xd4] sm:$0xf] %vm704, %v659
        %759 = vst.msk [vmem:[%s239 + $0xd8] sm:$0xf] %vm704, %v661
        %760 = vst.msk [vmem:[%s239 + $0xdc] sm:$0xf] %vm704, %v663
        %761 = vst.msk [vmem:[%s239 + $0xe0] sm:$0xf] %vm704, %v572
        %762 = vst.msk [vmem:[%s239 + $0xe4] sm:$0xf] %vm704, %v573
        %763 = vst.msk [vmem:[%s239 + $0xe8] sm:$0xf] %vm704, %v574
        %764 = vst.msk [vmem:[%s239 + $0xec] sm:$0xf] %vm704, %v575
        %765 = vst.msk [vmem:[%s239 + $0xf0] sm:$0xf] %vm704, %v665
        %766 = vst.msk [vmem:[%s239 + $0xf4] sm:$0xf] %vm704, %v667
        %767 = vst.msk [vmem:[%s239 + $0xf8] sm:$0xf] %vm704, %v669
        %768 = vst.msk [vmem:[%s239 + $0xfc] sm:$0xf] %vm704, %v671
        %s769 = smul.u32 16, %s23
        %p770 = scmp.lt.s32.totalorder %s22, 1
        %s771 = scalar_select %p770, %s22, 1
        %p772 = scmp.lt.s32.totalorder %s769, 63
        %s773 = scalar_select %p772, %s769, 63
        %s774 = smul.addr %s773, 4
        %s775 = smul.addr %s771, 256
        %s776 = sadd.s32 %s774, %s775
        %s777 = smul.addr %s776, 4
        %s778 = scalar_lea.vmem %s3, %s777
        // Predicated region
        $region41: #{tpu_custom_call.1} parent=31 // pred_check
          %p779 = pneg %p120
        $region42: #{tpu_custom_call.1} parent=31 // pred_check_branch
          %781 = sbr.rel (%p779) target = $region44
        $region43: #{tpu_custom_call.1} parent=31 // pred_region
          %s782 = smul.u32 16, %s23
        $region44: #{tpu_custom_call.1} parent=31 // pred_fallthru
          _
      $region32: #{tpu_custom_call.1} parent=5 // pred_fallthru
        _
      %p783 = scmp.le.s32.totalorder 2, %s13
      // Predicated region
      $region45: #{tpu_custom_call.1} parent=5 // pred_check
        %p784 = pneg %p783
      $region46: #{tpu_custom_call.1} parent=5 // pred_check_branch
        %786 = sbr.rel (%p784) target = $region48
      $region47: #{tpu_custom_call.1} parent=5 // pred_region
        %s787 = ssub.s32 %s13, 2
        // Predicated region
        $region49: #{tpu_custom_call.1} parent=47 // pred_check
          %p788 = pneg %p126
        $region50: #{tpu_custom_call.1} parent=47 // pred_check_branch
          %790 = sbr.rel (%p788) target = $region52
        $region51: #{tpu_custom_call.1} parent=47 // pred_region
          %s791 = smul.u32 16, %s25
          %p792 = scmp.lt.s32.totalorder %s24, 1
          %s793 = scalar_select %p792, %s24, 1
          %p794 = scmp.lt.s32.totalorder %s791, 63
          %s795 = scalar_select %p794, %s791, 63
          %s796 = smul.addr %s795, 4
          %s797 = smul.addr %s793, 256
          %s798 = sadd.s32 %s796, %s797
          %s799 = smul.addr %s798, 4
          %s800 = scalar_lea.vmem %s3, %s799
        $region52: #{tpu_custom_call.1} parent=47 // pred_fallthru
          _
      $region48: #{tpu_custom_call.1} parent=5 // pred_fallthru
        _
    $region6: #{tpu_custom_call.1} parent=1 // loop_footer
      %s17 = sadd.s32 1, %s13
    $region7: #{tpu_custom_call.1} parent=1 // loop_footer_branch
      %12 = sbr.rel target = $region3
    $region8: #{tpu_custom_call.1} parent=1 // loop_exit
      _
    %801 = vsyncpa [#allocation3], 1
    %s802 = scalar_lea.sflag [#allocation3], 1
    %803 = vsyncpa %s802, 1
    %804 = vsyncpa [#allocation5], 1

</llo_original>
